<compile_context>
chip_gen: v5e
topology: v5e:2x2
jax: 0.10.0
libtpu: 0.0.40
codegen_flags: <defaults>
</compile_context>

<pallas_src>
import jax
import jax.numpy as jnp
from jax import lax
from jax.experimental import pallas as pl
from jax.experimental.pallas import tpu as pltpu

LANE = 128  # TPU lane width; tag dimension padded to this for one dense store.


def lstm_tagger_kernel(sent_ref, emb_proj_ref, w_hh_ref, gsc_ref, gbi_ref,
                       w_out_ref, b_out_ref, o_ref):
    """Fused: gather pre-projected embedding rows + LSTM recurrence + head + log_softmax."""
    T = o_ref.shape[0]
    H = w_hh_ref.shape[0]

    w_hh = w_hh_ref[...]          # (H, 4H) recurrent weights
    gsc = gsc_ref[...]            # (1, 4H) gate scale: 2.0 on g lanes, 1.0 elsewhere
    gbi = gbi_ref[...]            # (1, 4H) gate bias : -1.0 on g lanes, 0.0 elsewhere

    # ---- fully unrolled recurrence; h/c and hidden rows stay in vregs --------
    h = jnp.zeros((1, H), jnp.float32)
    c = jnp.zeros((1, H), jnp.float32)
    h_rows = []
    for t in range(T):
        # Pre-projected input row (x_t @ W_ih + b), lane-dense, independent of h.
        x_row = emb_proj_ref[pl.ds(sent_ref[t], 1), :]                  # (1, 4H)
        gates = x_row + jnp.dot(h, w_hh, preferred_element_type=jnp.float32)
        # Single full-width sigmoid; g lanes become tanh via 2*sigmoid(2x)-1.
        act = jax.nn.sigmoid(gates * gsc) * gsc + gbi                   # (1, 4H)
        i = act[:, 0:H]
        f = act[:, H:2 * H]
        g = act[:, 2 * H:3 * H]
        o = act[:, 3 * H:4 * H]
        c = f * c + i * g
        h = o * jnp.tanh(c)
        h_rows.append(h)

    hs = jnp.concatenate(h_rows, axis=0)                                # (T, H)

    # ---- hidden2tag (lane-padded to 128) + numerically stable log_softmax ----
    tag_space = jnp.dot(hs, w_out_ref[...],
                        preferred_element_type=jnp.float32) + b_out_ref[...]
    m = jnp.max(tag_space, axis=-1, keepdims=True)
    lse = m + jnp.log(jnp.sum(jnp.exp(tag_space - m), axis=-1, keepdims=True))
    o_ref[...] = tag_space - lse                                        # (T, 128), one dense store


def init_params(key, embedding_dim, hidden_dim, vocab_size, tagset_size):
    ks = jax.random.split(key, 7)
    s = 0.1
    emb = jax.random.normal(ks[0], (vocab_size, embedding_dim), jnp.float32) * s
    # PyTorch nn.LSTM stores weight_ih_l0 (4H, E), weight_hh_l0 (4H, H); kept
    # pre-transposed here for the x @ W layout.  Gate order [i, f, g, o].
    w_ih_t = jax.random.normal(ks[1], (embedding_dim, 4 * hidden_dim), jnp.float32) * s
    w_hh_t = jax.random.normal(ks[2], (hidden_dim, 4 * hidden_dim), jnp.float32) * s
    b_ih = jax.random.normal(ks[3], (4 * hidden_dim,), jnp.float32) * s
    b_hh = jax.random.normal(ks[4], (4 * hidden_dim,), jnp.float32) * s
    w_out_t = jax.random.normal(ks[5], (hidden_dim, tagset_size), jnp.float32) * s
    b_out = jax.random.normal(ks[6], (tagset_size,), jnp.float32) * s
    return {
        "embedding": emb,
        "w_ih_t": w_ih_t,
        "w_hh_t": w_hh_t,
        "b": (b_ih + b_hh).reshape(1, 4 * hidden_dim),
        "w_out_t": w_out_t,
        "b_out": b_out.reshape(1, tagset_size),
    }


def lstm_tagger_forward(sentence, params):
    T = sentence.shape[0]
    vocab, E = params["embedding"].shape
    H = params["w_hh_t"].shape[0]
    G = 4 * H
    tagset = params["w_out_t"].shape[1]

    # ---- folded embedding + input projection (param-only transform) ----------
    emb_proj = params["embedding"] @ params["w_ih_t"] + params["b"]     # (vocab, 4H)

    # ---- gate lane scale/bias for the merged sigmoid/tanh activation ---------
    lanes = jnp.arange(G)
    is_g = (lanes >= 2 * H) & (lanes < 3 * H)
    gate_scale = jnp.where(is_g, 2.0, 1.0).astype(jnp.float32).reshape(1, G)
    gate_bias = jnp.where(is_g, -1.0, 0.0).astype(jnp.float32).reshape(1, G)

    # ---- lane-dense output head: pad tag dim to 128 ---------------------------
    pad = LANE - tagset
    w_out_pad = jnp.pad(params["w_out_t"], ((0, 0), (0, pad)))
    b_out_pad = jnp.pad(params["b_out"], ((0, 0), (0, pad)), constant_values=-1e9)

    flops = 2 * T * H * G + 2 * T * H * LANE
    transcendentals = T * (G + H) + T * LANE            # sigmoid, tanh(c), exp
    bytes_accessed = 4 * (vocab * G + H * G + 2 * G + H * LANE + LANE
                          + T * LANE) + 4 * T

    out_pad = pl.pallas_call(
        lstm_tagger_kernel,
        out_shape=jax.ShapeDtypeStruct((T, LANE), jnp.float32),
        in_specs=[
            pl.BlockSpec(memory_space=pltpu.MemorySpace.SMEM),   # sentence ids
            pl.BlockSpec(memory_space=pltpu.MemorySpace.VMEM),   # emb_proj (vocab, 4H)
            pl.BlockSpec(memory_space=pltpu.MemorySpace.VMEM),   # w_hh_t
            pl.BlockSpec(memory_space=pltpu.MemorySpace.VMEM),   # gate scale
            pl.BlockSpec(memory_space=pltpu.MemorySpace.VMEM),   # gate bias
            pl.BlockSpec(memory_space=pltpu.MemorySpace.VMEM),   # w_out (padded)
            pl.BlockSpec(memory_space=pltpu.MemorySpace.VMEM),   # b_out (padded)
        ],
        out_specs=pl.BlockSpec(memory_space=pltpu.MemorySpace.VMEM),
        cost_estimate=pl.CostEstimate(flops=flops,
                                      transcendentals=transcendentals,
                                      bytes_accessed=bytes_accessed),
    )(sentence.astype(jnp.int32), emb_proj, params["w_hh_t"],
      gate_scale, gate_bias, w_out_pad, b_out_pad)

    return out_pad[:, :tagset]


def lstm_tagger_reference(sentence, params):
    """Pure-JAX reference matching torch semantics (for validation)."""
    H = params["w_hh_t"].shape[0]
    x = params["embedding"][sentence]

    def step(carry, x_t):
        h, c = carry
        gates = x_t[None, :] @ params["w_ih_t"] + h @ params["w_hh_t"] + params["b"]
        i = jax.nn.sigmoid(gates[:, 0:H])
        f = jax.nn.sigmoid(gates[:, H:2 * H])
        g = jnp.tanh(gates[:, 2 * H:3 * H])
        o = jax.nn.sigmoid(gates[:, 3 * H:4 * H])
        c = f * c + i * g
        h = o * jnp.tanh(c)
        return (h, c), h[0]

    h0 = jnp.zeros((1, H), jnp.float32)
    c0 = jnp.zeros((1, H), jnp.float32)
    _, hs = lax.scan(step, (h0, c0), x)
    tag_space = hs @ params["w_out_t"] + params["b_out"]
    return jax.nn.log_softmax(tag_space, axis=1)


if __name__ == "__main__":
    EMBEDDING_DIM = 32
    HIDDEN_DIM = 32
    VOCAB_SIZE = 20
    TAGSET_SIZE = 5
    SEQ_LEN = 8

    key = jax.random.PRNGKey(0)
    pkey, skey = jax.random.split(key)
    params = init_params(pkey, EMBEDDING_DIM, HIDDEN_DIM, VOCAB_SIZE, TAGSET_SIZE)
    sentence = jax.random.randint(skey, (SEQ_LEN,), 0, VOCAB_SIZE, dtype=jnp.int32)

    tag_scores = lstm_tagger_forward(sentence, params)
    jax.block_until_ready(tag_scores)

    ref = lstm_tagger_reference(sentence, params)
    assert tag_scores.shape == (SEQ_LEN, TAGSET_SIZE)
    assert jnp.allclose(tag_scores, ref, atol=2e-3, rtol=2e-3)

    print("KERNEL_OK")
</pallas_src>

<mosaic_0001>
module attributes {stable_mosaic.version = 11 : i64} {
  func.func @lstm_tagger_kernel(%arg0: memref<8xi32, #tpu.memory_space<smem>>, %arg1: memref<20x128xf32, #tpu.memory_space<vmem>>, %arg2: memref<32x128xf32, #tpu.memory_space<vmem>>, %arg3: memref<1x128xf32, #tpu.memory_space<vmem>>, %arg4: memref<1x128xf32, #tpu.memory_space<vmem>>, %arg5: memref<32x128xf32, #tpu.memory_space<vmem>>, %arg6: memref<1x128xf32, #tpu.memory_space<vmem>>, %arg7: memref<8x128xf32, #tpu.memory_space<vmem>>) attributes {dimension_semantics = [], scalar_prefetch = 0 : i64, scratch_operands = 0 : i64, tpu.core_type = #tpu.core_type<tc>} {
    %c0 = arith.constant 0 : index
    %c0_0 = arith.constant 0 : index
    %0 = vector.load %arg2[%c0, %c0_0] : memref<32x128xf32, #tpu.memory_space<vmem>>, vector<32x128xf32>
    %c0_1 = arith.constant 0 : index
    %c0_2 = arith.constant 0 : index
    %1 = vector.load %arg3[%c0_1, %c0_2] : memref<1x128xf32, #tpu.memory_space<vmem>>, vector<1x128xf32>
    %c0_3 = arith.constant 0 : index
    %c0_4 = arith.constant 0 : index
    %2 = vector.load %arg4[%c0_3, %c0_4] : memref<1x128xf32, #tpu.memory_space<vmem>>, vector<1x128xf32>
    %cst = arith.constant 0.000000e+00 : f32
    %3 = vector.broadcast %cst : f32 to vector<1x32xf32>
    %cst_5 = arith.constant 0.000000e+00 : f32
    %4 = vector.broadcast %cst_5 : f32 to vector<1x32xf32>
    %c0_6 = arith.constant 0 : index
    %5 = memref.load %arg0[%c0_6] : memref<8xi32, #tpu.memory_space<smem>>
    %6 = arith.index_cast %5 : i32 to index
    %c0_7 = arith.constant 0 : index
    %7 = vector.load %arg1[%6, %c0_7] : memref<20x128xf32, #tpu.memory_space<vmem>>, vector<1x128xf32>
    %cst_8 = arith.constant dense<0.000000e+00> : vector<1x128xf32>
    %8 = tpu.matmul %3, %0, %cst_8 {dimension_numbers = #tpu.dot_dimension_numbers<[1], [0], [0], [1], [0, 0, 1, 1], [], []>} : vector<1x32xf32>, vector<32x128xf32>, vector<1x128xf32> -> vector<1x128xf32>
    %9 = arith.addf %7, %8 : vector<1x128xf32>
    %10 = arith.mulf %9, %1 : vector<1x128xf32>
    %11 = arith.negf %10 : vector<1x128xf32>
    %12 = math.exp %11 : vector<1x128xf32>
    %cst_9 = arith.constant 1.000000e+00 : f32
    %13 = vector.broadcast %cst_9 : f32 to vector<1x128xf32>
    %14 = arith.addf %13, %12 : vector<1x128xf32>
    %15 = arith.divf %13, %14 : vector<1x128xf32>
    %16 = arith.mulf %15, %1 : vector<1x128xf32>
    %17 = arith.addf %16, %2 : vector<1x128xf32>
    %18 = vector.extract_strided_slice %17 {offsets = [0, 0], sizes = [1, 32], strides = [1, 1]} : vector<1x128xf32> to vector<1x32xf32>
    %19 = vector.extract_strided_slice %17 {offsets = [0, 32], sizes = [1, 32], strides = [1, 1]} : vector<1x128xf32> to vector<1x32xf32>
    %20 = vector.extract_strided_slice %17 {offsets = [0, 64], sizes = [1, 32], strides = [1, 1]} : vector<1x128xf32> to vector<1x32xf32>
    %21 = vector.extract_strided_slice %17 {offsets = [0, 96], sizes = [1, 32], strides = [1, 1]} : vector<1x128xf32> to vector<1x32xf32>
    %22 = arith.mulf %19, %4 : vector<1x32xf32>
    %23 = arith.mulf %18, %20 : vector<1x32xf32>
    %24 = arith.addf %22, %23 : vector<1x32xf32>
    %25 = math.tanh %24 : vector<1x32xf32>
    %26 = arith.mulf %21, %25 : vector<1x32xf32>
    %c1 = arith.constant 1 : index
    %27 = memref.load %arg0[%c1] : memref<8xi32, #tpu.memory_space<smem>>
    %28 = arith.index_cast %27 : i32 to index
    %c0_10 = arith.constant 0 : index
    %29 = vector.load %arg1[%28, %c0_10] : memref<20x128xf32, #tpu.memory_space<vmem>>, vector<1x128xf32>
    %cst_11 = arith.constant dense<0.000000e+00> : vector<1x128xf32>
    %30 = tpu.matmul %26, %0, %cst_11 {dimension_numbers = #tpu.dot_dimension_numbers<[1], [0], [0], [1], [0, 0, 1, 1], [], []>} : vector<1x32xf32>, vector<32x128xf32>, vector<1x128xf32> -> vector<1x128xf32>
    %31 = arith.addf %29, %30 : vector<1x128xf32>
    %32 = arith.mulf %31, %1 : vector<1x128xf32>
    %33 = arith.negf %32 : vector<1x128xf32>
    %34 = math.exp %33 : vector<1x128xf32>
    %cst_12 = arith.constant 1.000000e+00 : f32
    %35 = vector.broadcast %cst_12 : f32 to vector<1x128xf32>
    %36 = arith.addf %35, %34 : vector<1x128xf32>
    %37 = arith.divf %35, %36 : vector<1x128xf32>
    %38 = arith.mulf %37, %1 : vector<1x128xf32>
    %39 = arith.addf %38, %2 : vector<1x128xf32>
    %40 = vector.extract_strided_slice %39 {offsets = [0, 0], sizes = [1, 32], strides = [1, 1]} : vector<1x128xf32> to vector<1x32xf32>
    %41 = vector.extract_strided_slice %39 {offsets = [0, 32], sizes = [1, 32], strides = [1, 1]} : vector<1x128xf32> to vector<1x32xf32>
    %42 = vector.extract_strided_slice %39 {offsets = [0, 64], sizes = [1, 32], strides = [1, 1]} : vector<1x128xf32> to vector<1x32xf32>
    %43 = vector.extract_strided_slice %39 {offsets = [0, 96], sizes = [1, 32], strides = [1, 1]} : vector<1x128xf32> to vector<1x32xf32>
    %44 = arith.mulf %41, %24 : vector<1x32xf32>
    %45 = arith.mulf %40, %42 : vector<1x32xf32>
    %46 = arith.addf %44, %45 : vector<1x32xf32>
    %47 = math.tanh %46 : vector<1x32xf32>
    %48 = arith.mulf %43, %47 : vector<1x32xf32>
    %c2 = arith.constant 2 : index
    %49 = memref.load %arg0[%c2] : memref<8xi32, #tpu.memory_space<smem>>
    %50 = arith.index_cast %49 : i32 to index
    %c0_13 = arith.constant 0 : index
    %51 = vector.load %arg1[%50, %c0_13] : memref<20x128xf32, #tpu.memory_space<vmem>>, vector<1x128xf32>
    %cst_14 = arith.constant dense<0.000000e+00> : vector<1x128xf32>
    %52 = tpu.matmul %48, %0, %cst_14 {dimension_numbers = #tpu.dot_dimension_numbers<[1], [0], [0], [1], [0, 0, 1, 1], [], []>} : vector<1x32xf32>, vector<32x128xf32>, vector<1x128xf32> -> vector<1x128xf32>
    %53 = arith.addf %51, %52 : vector<1x128xf32>
    %54 = arith.mulf %53, %1 : vector<1x128xf32>
    %55 = arith.negf %54 : vector<1x128xf32>
    %56 = math.exp %55 : vector<1x128xf32>
    %cst_15 = arith.constant 1.000000e+00 : f32
    %57 = vector.broadcast %cst_15 : f32 to vector<1x128xf32>
    %58 = arith.addf %57, %56 : vector<1x128xf32>
    %59 = arith.divf %57, %58 : vector<1x128xf32>
    %60 = arith.mulf %59, %1 : vector<1x128xf32>
    %61 = arith.addf %60, %2 : vector<1x128xf32>
    %62 = vector.extract_strided_slice %61 {offsets = [0, 0], sizes = [1, 32], strides = [1, 1]} : vector<1x128xf32> to vector<1x32xf32>
    %63 = vector.extract_strided_slice %61 {offsets = [0, 32], sizes = [1, 32], strides = [1, 1]} : vector<1x128xf32> to vector<1x32xf32>
    %64 = vector.extract_strided_slice %61 {offsets = [0, 64], sizes = [1, 32], strides = [1, 1]} : vector<1x128xf32> to vector<1x32xf32>
    %65 = vector.extract_strided_slice %61 {offsets = [0, 96], sizes = [1, 32], strides = [1, 1]} : vector<1x128xf32> to vector<1x32xf32>
    %66 = arith.mulf %63, %46 : vector<1x32xf32>
    %67 = arith.mulf %62, %64 : vector<1x32xf32>
    %68 = arith.addf %66, %67 : vector<1x32xf32>
    %69 = math.tanh %68 : vector<1x32xf32>
    %70 = arith.mulf %65, %69 : vector<1x32xf32>
    %c3 = arith.constant 3 : index
    %71 = memref.load %arg0[%c3] : memref<8xi32, #tpu.memory_space<smem>>
    %72 = arith.index_cast %71 : i32 to index
    %c0_16 = arith.constant 0 : index
    %73 = vector.load %arg1[%72, %c0_16] : memref<20x128xf32, #tpu.memory_space<vmem>>, vector<1x128xf32>
    %cst_17 = arith.constant dense<0.000000e+00> : vector<1x128xf32>
    %74 = tpu.matmul %70, %0, %cst_17 {dimension_numbers = #tpu.dot_dimension_numbers<[1], [0], [0], [1], [0, 0, 1, 1], [], []>} : vector<1x32xf32>, vector<32x128xf32>, vector<1x128xf32> -> vector<1x128xf32>
    %75 = arith.addf %73, %74 : vector<1x128xf32>
    %76 = arith.mulf %75, %1 : vector<1x128xf32>
    %77 = arith.negf %76 : vector<1x128xf32>
    %78 = math.exp %77 : vector<1x128xf32>
    %cst_18 = arith.constant 1.000000e+00 : f32
    %79 = vector.broadcast %cst_18 : f32 to vector<1x128xf32>
    %80 = arith.addf %79, %78 : vector<1x128xf32>
    %81 = arith.divf %79, %80 : vector<1x128xf32>
    %82 = arith.mulf %81, %1 : vector<1x128xf32>
    %83 = arith.addf %82, %2 : vector<1x128xf32>
    %84 = vector.extract_strided_slice %83 {offsets = [0, 0], sizes = [1, 32], strides = [1, 1]} : vector<1x128xf32> to vector<1x32xf32>
    %85 = vector.extract_strided_slice %83 {offsets = [0, 32], sizes = [1, 32], strides = [1, 1]} : vector<1x128xf32> to vector<1x32xf32>
    %86 = vector.extract_strided_slice %83 {offsets = [0, 64], sizes = [1, 32], strides = [1, 1]} : vector<1x128xf32> to vector<1x32xf32>
    %87 = vector.extract_strided_slice %83 {offsets = [0, 96], sizes = [1, 32], strides = [1, 1]} : vector<1x128xf32> to vector<1x32xf32>
    %88 = arith.mulf %85, %68 : vector<1x32xf32>
    %89 = arith.mulf %84, %86 : vector<1x32xf32>
    %90 = arith.addf %88, %89 : vector<1x32xf32>
    %91 = math.tanh %90 : vector<1x32xf32>
    %92 = arith.mulf %87, %91 : vector<1x32xf32>
    %c4 = arith.constant 4 : index
    %93 = memref.load %arg0[%c4] : memref<8xi32, #tpu.memory_space<smem>>
    %94 = arith.index_cast %93 : i32 to index
    %c0_19 = arith.constant 0 : index
    %95 = vector.load %arg1[%94, %c0_19] : memref<20x128xf32, #tpu.memory_space<vmem>>, vector<1x128xf32>
    %cst_20 = arith.constant dense<0.000000e+00> : vector<1x128xf32>
    %96 = tpu.matmul %92, %0, %cst_20 {dimension_numbers = #tpu.dot_dimension_numbers<[1], [0], [0], [1], [0, 0, 1, 1], [], []>} : vector<1x32xf32>, vector<32x128xf32>, vector<1x128xf32> -> vector<1x128xf32>
    %97 = arith.addf %95, %96 : vector<1x128xf32>
    %98 = arith.mulf %97, %1 : vector<1x128xf32>
    %99 = arith.negf %98 : vector<1x128xf32>
    %100 = math.exp %99 : vector<1x128xf32>
    %cst_21 = arith.constant 1.000000e+00 : f32
    %101 = vector.broadcast %cst_21 : f32 to vector<1x128xf32>
    %102 = arith.addf %101, %100 : vector<1x128xf32>
    %103 = arith.divf %101, %102 : vector<1x128xf32>
    %104 = arith.mulf %103, %1 : vector<1x128xf32>
    %105 = arith.addf %104, %2 : vector<1x128xf32>
    %106 = vector.extract_strided_slice %105 {offsets = [0, 0], sizes = [1, 32], strides = [1, 1]} : vector<1x128xf32> to vector<1x32xf32>
    %107 = vector.extract_strided_slice %105 {offsets = [0, 32], sizes = [1, 32], strides = [1, 1]} : vector<1x128xf32> to vector<1x32xf32>
    %108 = vector.extract_strided_slice %105 {offsets = [0, 64], sizes = [1, 32], strides = [1, 1]} : vector<1x128xf32> to vector<1x32xf32>
    %109 = vector.extract_strided_slice %105 {offsets = [0, 96], sizes = [1, 32], strides = [1, 1]} : vector<1x128xf32> to vector<1x32xf32>
    %110 = arith.mulf %107, %90 : vector<1x32xf32>
    %111 = arith.mulf %106, %108 : vector<1x32xf32>
    %112 = arith.addf %110, %111 : vector<1x32xf32>
    %113 = math.tanh %112 : vector<1x32xf32>
    %114 = arith.mulf %109, %113 : vector<1x32xf32>
    %c5 = arith.constant 5 : index
    %115 = memref.load %arg0[%c5] : memref<8xi32, #tpu.memory_space<smem>>
    %116 = arith.index_cast %115 : i32 to index
    %c0_22 = arith.constant 0 : index
    %117 = vector.load %arg1[%116, %c0_22] : memref<20x128xf32, #tpu.memory_space<vmem>>, vector<1x128xf32>
    %cst_23 = arith.constant dense<0.000000e+00> : vector<1x128xf32>
    %118 = tpu.matmul %114, %0, %cst_23 {dimension_numbers = #tpu.dot_dimension_numbers<[1], [0], [0], [1], [0, 0, 1, 1], [], []>} : vector<1x32xf32>, vector<32x128xf32>, vector<1x128xf32> -> vector<1x128xf32>
    %119 = arith.addf %117, %118 : vector<1x128xf32>
    %120 = arith.mulf %119, %1 : vector<1x128xf32>
    %121 = arith.negf %120 : vector<1x128xf32>
    %122 = math.exp %121 : vector<1x128xf32>
    %cst_24 = arith.constant 1.000000e+00 : f32
    %123 = vector.broadcast %cst_24 : f32 to vector<1x128xf32>
    %124 = arith.addf %123, %122 : vector<1x128xf32>
    %125 = arith.divf %123, %124 : vector<1x128xf32>
    %126 = arith.mulf %125, %1 : vector<1x128xf32>
    %127 = arith.addf %126, %2 : vector<1x128xf32>
    %128 = vector.extract_strided_slice %127 {offsets = [0, 0], sizes = [1, 32], strides = [1, 1]} : vector<1x128xf32> to vector<1x32xf32>
    %129 = vector.extract_strided_slice %127 {offsets = [0, 32], sizes = [1, 32], strides = [1, 1]} : vector<1x128xf32> to vector<1x32xf32>
    %130 = vector.extract_strided_slice %127 {offsets = [0, 64], sizes = [1, 32], strides = [1, 1]} : vector<1x128xf32> to vector<1x32xf32>
    %131 = vector.extract_strided_slice %127 {offsets = [0, 96], sizes = [1, 32], strides = [1, 1]} : vector<1x128xf32> to vector<1x32xf32>
    %132 = arith.mulf %129, %112 : vector<1x32xf32>
    %133 = arith.mulf %128, %130 : vector<1x32xf32>
    %134 = arith.addf %132, %133 : vector<1x32xf32>
    %135 = math.tanh %134 : vector<1x32xf32>
    %136 = arith.mulf %131, %135 : vector<1x32xf32>
    %c6 = arith.constant 6 : index
    %137 = memref.load %arg0[%c6] : memref<8xi32, #tpu.memory_space<smem>>
    %138 = arith.index_cast %137 : i32 to index
    %c0_25 = arith.constant 0 : index
    %139 = vector.load %arg1[%138, %c0_25] : memref<20x128xf32, #tpu.memory_space<vmem>>, vector<1x128xf32>
    %cst_26 = arith.constant dense<0.000000e+00> : vector<1x128xf32>
    %140 = tpu.matmul %136, %0, %cst_26 {dimension_numbers = #tpu.dot_dimension_numbers<[1], [0], [0], [1], [0, 0, 1, 1], [], []>} : vector<1x32xf32>, vector<32x128xf32>, vector<1x128xf32> -> vector<1x128xf32>
    %141 = arith.addf %139, %140 : vector<1x128xf32>
    %142 = arith.mulf %141, %1 : vector<1x128xf32>
    %143 = arith.negf %142 : vector<1x128xf32>
    %144 = math.exp %143 : vector<1x128xf32>
    %cst_27 = arith.constant 1.000000e+00 : f32
    %145 = vector.broadcast %cst_27 : f32 to vector<1x128xf32>
    %146 = arith.addf %145, %144 : vector<1x128xf32>
    %147 = arith.divf %145, %146 : vector<1x128xf32>
    %148 = arith.mulf %147, %1 : vector<1x128xf32>
    %149 = arith.addf %148, %2 : vector<1x128xf32>
    %150 = vector.extract_strided_slice %149 {offsets = [0, 0], sizes = [1, 32], strides = [1, 1]} : vector<1x128xf32> to vector<1x32xf32>
    %151 = vector.extract_strided_slice %149 {offsets = [0, 32], sizes = [1, 32], strides = [1, 1]} : vector<1x128xf32> to vector<1x32xf32>
    %152 = vector.extract_strided_slice %149 {offsets = [0, 64], sizes = [1, 32], strides = [1, 1]} : vector<1x128xf32> to vector<1x32xf32>
    %153 = vector.extract_strided_slice %149 {offsets = [0, 96], sizes = [1, 32], strides = [1, 1]} : vector<1x128xf32> to vector<1x32xf32>
    %154 = arith.mulf %151, %134 : vector<1x32xf32>
    %155 = arith.mulf %150, %152 : vector<1x32xf32>
    %156 = arith.addf %154, %155 : vector<1x32xf32>
    %157 = math.tanh %156 : vector<1x32xf32>
    %158 = arith.mulf %153, %157 : vector<1x32xf32>
    %c7 = arith.constant 7 : index
    %159 = memref.load %arg0[%c7] : memref<8xi32, #tpu.memory_space<smem>>
    %160 = arith.index_cast %159 : i32 to index
    %c0_28 = arith.constant 0 : index
    %161 = vector.load %arg1[%160, %c0_28] : memref<20x128xf32, #tpu.memory_space<vmem>>, vector<1x128xf32>
    %cst_29 = arith.constant dense<0.000000e+00> : vector<1x128xf32>
    %162 = tpu.matmul %158, %0, %cst_29 {dimension_numbers = #tpu.dot_dimension_numbers<[1], [0], [0], [1], [0, 0, 1, 1], [], []>} : vector<1x32xf32>, vector<32x128xf32>, vector<1x128xf32> -> vector<1x128xf32>
    %163 = arith.addf %161, %162 : vector<1x128xf32>
    %164 = arith.mulf %163, %1 : vector<1x128xf32>
    %165 = arith.negf %164 : vector<1x128xf32>
    %166 = math.exp %165 : vector<1x128xf32>
    %cst_30 = arith.constant 1.000000e+00 : f32
    %167 = vector.broadcast %cst_30 : f32 to vector<1x128xf32>
    %168 = arith.addf %167, %166 : vector<1x128xf32>
    %169 = arith.divf %167, %168 : vector<1x128xf32>
    %170 = arith.mulf %169, %1 : vector<1x128xf32>
    %171 = arith.addf %170, %2 : vector<1x128xf32>
    %172 = vector.extract_strided_slice %171 {offsets = [0, 0], sizes = [1, 32], strides = [1, 1]} : vector<1x128xf32> to vector<1x32xf32>
    %173 = vector.extract_strided_slice %171 {offsets = [0, 32], sizes = [1, 32], strides = [1, 1]} : vector<1x128xf32> to vector<1x32xf32>
    %174 = vector.extract_strided_slice %171 {offsets = [0, 64], sizes = [1, 32], strides = [1, 1]} : vector<1x128xf32> to vector<1x32xf32>
    %175 = vector.extract_strided_slice %171 {offsets = [0, 96], sizes = [1, 32], strides = [1, 1]} : vector<1x128xf32> to vector<1x32xf32>
    %176 = arith.mulf %173, %156 : vector<1x32xf32>
    %177 = arith.mulf %172, %174 : vector<1x32xf32>
    %178 = arith.addf %176, %177 : vector<1x32xf32>
    %179 = math.tanh %178 : vector<1x32xf32>
    %180 = arith.mulf %175, %179 : vector<1x32xf32>
    %181 = tpu.concatenate %26, %48, %70, %92, %114, %136, %158, %180 in 0 : vector<1x32xf32>, vector<1x32xf32>, vector<1x32xf32>, vector<1x32xf32>, vector<1x32xf32>, vector<1x32xf32>, vector<1x32xf32>, vector<1x32xf32> -> vector<8x32xf32>
    %c0_31 = arith.constant 0 : index
    %c0_32 = arith.constant 0 : index
    %182 = vector.load %arg5[%c0_31, %c0_32] : memref<32x128xf32, #tpu.memory_space<vmem>>, vector<32x128xf32>
    %cst_33 = arith.constant dense<0.000000e+00> : vector<8x128xf32>
    %183 = tpu.matmul %181, %182, %cst_33 {dimension_numbers = #tpu.dot_dimension_numbers<[1], [0], [0], [1], [0, 0, 1, 1], [], []>} : vector<8x32xf32>, vector<32x128xf32>, vector<8x128xf32> -> vector<8x128xf32>
    %c0_34 = arith.constant 0 : index
    %c0_35 = arith.constant 0 : index
    %184 = vector.load %arg6[%c0_34, %c0_35] : memref<1x128xf32, #tpu.memory_space<vmem>>, vector<1x128xf32>
    %185 = vector.broadcast %184 : vector<1x128xf32> to vector<8x128xf32>
    %186 = arith.addf %183, %185 : vector<8x128xf32>
    %cst_36 = arith.constant dense<0xFF800000> : vector<8xf32>
    %187 = vector.multi_reduction <maximumf>, %186, %cst_36 [1] : vector<8x128xf32> to vector<8xf32>
    %188 = vector.shape_cast %187 : vector<8xf32> to vector<8x1xf32>
    %189 = vector.broadcast %188 : vector<8x1xf32> to vector<8x128xf32>
    %190 = arith.subf %186, %189 : vector<8x128xf32>
    %191 = math.exp %190 : vector<8x128xf32>
    %cst_37 = arith.constant dense<0.000000e+00> : vector<8xf32>
    %192 = vector.multi_reduction <add>, %191, %cst_37 [1] : vector<8x128xf32> to vector<8xf32>
    %193 = vector.shape_cast %192 : vector<8xf32> to vector<8x1xf32>
    %194 = math.log %193 : vector<8x1xf32>
    %195 = arith.addf %188, %194 : vector<8x1xf32>
    %196 = vector.broadcast %195 : vector<8x1xf32> to vector<8x128xf32>
    %197 = arith.subf %186, %196 : vector<8x128xf32>
    %c0_38 = arith.constant 0 : index
    %c0_39 = arith.constant 0 : index
    %198 = vector.load %arg7[%c0_38, %c0_39] : memref<8x128xf32, #tpu.memory_space<vmem>>, vector<8x128xf32>
    tpu.vector_store %arg7[%c0_38, %c0_39], %197 {strides = array<i32>} : memref<8x128xf32, #tpu.memory_space<vmem>>, vector<8x128xf32>,
    return
  }
}

</mosaic_0001>

<llo_original>
// kernel: tpu_custom_call.1
$region0: #{tpu_custom_call.1}
  #allocation0 [shape = 'u32[]', space=smem, size = 0x4, offset = 0x4, fixed_abs, tag = 'smem constant byte address 0x4 - core index']
  #allocation1 [shape = 'u32[72,128]{1,0:T(1,128)}', space=vmem, size = 0x9000, scoped, tag = 'internal scratch']
  %s0 = inlined_call_operand.hbm [shape: s32[8], index: 0, kind: input, shape index: {}]
  %s1 = inlined_call_operand.hbm [shape: f32[20,128], index: 1, kind: input, shape index: {}]
  %s2 = inlined_call_operand.hbm [shape: f32[32,128], index: 2, kind: input, shape index: {}]
  %s3 = inlined_call_operand.vmem [shape: f32[1,128], index: 3, kind: input, shape index: {}]
  %s4 = inlined_call_operand.vmem [shape: f32[1,128], index: 4, kind: input, shape index: {}]
  %s5 = inlined_call_operand.hbm [shape: f32[32,128], index: 5, kind: input, shape index: {}]
  %s6 = inlined_call_operand.vmem [shape: f32[1,128], index: 6, kind: input, shape index: {}]
  %s7 = inlined_call_operand.hbm [shape: f32[8,128], index: 7, kind: output, shape index: {}]
  %s8 = sld [smem:[#allocation0]]
  $region54: #{tpu_custom_call.1} parent=0
    _
  %s10 = ssub.s32 1, %s8
  %s11 = scalar_select 0, %s10, %s8
  $region1: #{tpu_custom_call.1} parent=0
    #allocation2 [shape = 'u8[512]{0}', space=smem, size = 0x200, scoped, tag = 'input window, operand 0, single buffered']
    #allocation3 [shape = 's32[1]{0}', space=sflag, size = 0x4, scoped, tag = 'scoped memory for tpu_custom_call.1']
    #allocation4 [shape = 's32[1]{0}', space=sflag, size = 0x4, scoped, tag = 'scoped memory for tpu_custom_call.1']
    #allocation5 [shape = 's32[1]{0}', space=sflag, size = 0x4, scoped, tag = 'scoped memory for tpu_custom_call.1']
    #allocation6 [shape = 'u8[12288]{0}', space=vmem, size = 0x3000, scoped, tag = 'input window, operand 1, single buffered']
    #allocation7 [shape = 'u8[16384]{0}', space=vmem, size = 0x4000, scoped, tag = 'input window, operand 2, single buffered']
    #allocation8 [shape = 's32[1]{0}', space=sflag, size = 0x4, scoped, tag = 'scoped memory for tpu_custom_call.1']
    #allocation9 [shape = 'u8[16384]{0}', space=vmem, size = 0x4000, scoped, tag = 'input window, operand 5, single buffered']
    #allocation10 [shape = 'u8[4096]{0}', space=vmem, size = 0x1000, scoped, tag = 'output window, operand 0, single buffered']
    %12 = vsyncpa [#allocation5], 0
    %13 = vsyncpa [#allocation3], 0
    %14 = vsyncpa [#allocation8], 0
    %15 = vsyncpa [#allocation4], 0
    // Predicated region
    $region2: #{tpu_custom_call.1} parent=1 // pred_check
      _
    $region3: #{tpu_custom_call.1} parent=1 // pred_check_branch
      %17 = sbr.rel (0) target = $region5
    $region4: #{tpu_custom_call.1} parent=1 // pred_region
      %19 = vsyncadd [#allocation5], 0
      %s21 = sshll.u32 %s0, 4
      %s22 = int_to_ptr.hbm [resolvable:$true] %s21
      %24 = dma.hbm_to_smem %s22, 16, [#allocation2], [#allocation5]
    $region5: #{tpu_custom_call.1} parent=1 // pred_fallthru
      _
    // Predicated region
    $region6: #{tpu_custom_call.1} parent=1 // pred_check
      _
    $region7: #{tpu_custom_call.1} parent=1 // pred_check_branch
      %26 = sbr.rel (0) target = $region9
    $region8: #{tpu_custom_call.1} parent=1 // pred_region
      %28 = vsyncadd [#allocation3], 0
      %s29 = sshll.u32 %s1, 4
      %s30 = int_to_ptr.hbm [resolvable:$true] %s29
      %s31 = sshll.u32 [#allocation6], 4
      %s32 = int_to_ptr.vmem [resolvable:$true] %s31
      %37 = dma.hbm_to_vmem [thread:$0]  %s30, 384, %s32, [#allocation3], 128, 128, 8
    $region9: #{tpu_custom_call.1} parent=1 // pred_fallthru
      _
    // Predicated region
    $region10: #{tpu_custom_call.1} parent=1 // pred_check
      _
    $region11: #{tpu_custom_call.1} parent=1 // pred_check_branch
      %39 = sbr.rel (0) target = $region13
    $region12: #{tpu_custom_call.1} parent=1 // pred_region
      %41 = vsyncadd [#allocation8], 0
      %s42 = sshll.u32 %s2, 4
      %s43 = int_to_ptr.hbm [resolvable:$true] %s42
      %s44 = sshll.u32 [#allocation7], 4
      %s45 = int_to_ptr.vmem [resolvable:$true] %s44
      %50 = dma.hbm_to_vmem [thread:$0]  %s43, 512, %s45, [#allocation8], 128, 128, 8
    $region13: #{tpu_custom_call.1} parent=1 // pred_fallthru
      _
    // Predicated region
    $region14: #{tpu_custom_call.1} parent=1 // pred_check
      _
    $region15: #{tpu_custom_call.1} parent=1 // pred_check_branch
      %52 = sbr.rel (0) target = $region17
    $region16: #{tpu_custom_call.1} parent=1 // pred_region
      _
    $region17: #{tpu_custom_call.1} parent=1 // pred_fallthru
      _
    // Predicated region
    $region18: #{tpu_custom_call.1} parent=1 // pred_check
      _
    $region19: #{tpu_custom_call.1} parent=1 // pred_check_branch
      %54 = sbr.rel (0) target = $region21
    $region20: #{tpu_custom_call.1} parent=1 // pred_region
      _
    $region21: #{tpu_custom_call.1} parent=1 // pred_fallthru
      _
    // Predicated region
    $region22: #{tpu_custom_call.1} parent=1 // pred_check
      _
    $region23: #{tpu_custom_call.1} parent=1 // pred_check_branch
      %56 = sbr.rel (0) target = $region25
    $region24: #{tpu_custom_call.1} parent=1 // pred_region
      %58 = vsyncadd [#allocation8], 0
      %s59 = sshll.u32 %s5, 4
      %s60 = int_to_ptr.hbm [resolvable:$true] %s59
      %s61 = sshll.u32 [#allocation9], 4
      %s62 = int_to_ptr.vmem [resolvable:$true] %s61
      %67 = dma.hbm_to_vmem [thread:$0]  %s60, 512, %s62, [#allocation8], 128, 128, 8
    $region25: #{tpu_custom_call.1} parent=1 // pred_fallthru
      _
    // Predicated region
    $region26: #{tpu_custom_call.1} parent=1 // pred_check
      _
    $region27: #{tpu_custom_call.1} parent=1 // pred_check_branch
      %69 = sbr.rel (0) target = $region29
    $region28: #{tpu_custom_call.1} parent=1 // pred_region
      _
    $region29: #{tpu_custom_call.1} parent=1 // pred_fallthru
      _
    // Predicated region
    $region30: #{tpu_custom_call.1} parent=1 // pred_check
      _
    $region31: #{tpu_custom_call.1} parent=1 // pred_check_branch
      %71 = sbr.rel (0) target = $region33
    $region32: #{tpu_custom_call.1} parent=1 // pred_region
      %73 = dma.done [#allocation5], 16
    $region33: #{tpu_custom_call.1} parent=1 // pred_fallthru
      _
    // Predicated region
    $region34: #{tpu_custom_call.1} parent=1 // pred_check
      _
    $region35: #{tpu_custom_call.1} parent=1 // pred_check_branch
      %75 = sbr.rel (0) target = $region37
    $region36: #{tpu_custom_call.1} parent=1 // pred_region
      %77 = dma.done [#allocation3], 384
    $region37: #{tpu_custom_call.1} parent=1 // pred_fallthru
      _
    // Predicated region
    $region38: #{tpu_custom_call.1} parent=1 // pred_check
      _
    $region39: #{tpu_custom_call.1} parent=1 // pred_check_branch
      %79 = sbr.rel (0) target = $region41
    $region40: #{tpu_custom_call.1} parent=1 // pred_region
      %81 = dma.done [#allocation8], 512
    $region41: #{tpu_custom_call.1} parent=1 // pred_fallthru
      _
    // Predicated region
    $region42: #{tpu_custom_call.1} parent=1 // pred_check
      _
    $region43: #{tpu_custom_call.1} parent=1 // pred_check_branch
      %83 = sbr.rel (0) target = $region45
    $region44: #{tpu_custom_call.1} parent=1 // pred_region
      %85 = dma.done [#allocation8], 512
    $region45: #{tpu_custom_call.1} parent=1 // pred_fallthru
      _
    %86 = sfence
    %v87 = vld [vmem:[#allocation7] sm:$0xff]
    %v88 = vld [vmem:[#allocation7 + $0x8] sm:$0xff]
    %v89 = vld [vmem:[#allocation7 + $0x10] sm:$0xff]
    %v90 = vld [vmem:[#allocation7 + $0x18] sm:$0xff]
    %v91 = vld [vmem:[%s3] sm:$0x1]
    %v92 = vld [vmem:[%s4] sm:$0x1]
    %s93 = sld [smem:[#allocation2]]
    %s94 = scalar_lea.vmem [#allocation6], %s93
    %v95 = vld [vmem:[%s94] sm:$0x1]
    %vm96 = vcmask 261120
    %v98 = vsel %vm96, 0.0, 0
    %100 = vmatpush.msra.mxu0 0.0
    %101 = vmatpush.msra.mxu0 0.0
    %102 = vmatpush.msra.mxu0 0.0
    %103 = vmatpush.msra.mxu0 0.0
    %104 = vmatpush.msra.mxu0 0.0
    %105 = vmatpush.msra.mxu0 0.0
    %106 = vmatpush.msra.mxu0 0.0
    %107 = vmatpush.msra.mxu0 0.0
    %108 = vmatpush.msra.mxu0 0.0
    %109 = vmatpush.msra.mxu0 0.0
    %110 = vmatpush.msra.mxu0 0.0
    %111 = vmatpush.msra.mxu0 0.0
    %112 = vmatpush.msra.mxu0 %v90
    %113 = vmatpush.msra.mxu0 %v89
    %114 = vmatpush.msra.mxu0 %v88
    %115 = vmatpush.msra.mxu0 %v87
    %116 = vmatmul.f32.gmra.mxu0 %v98
    %v117 = vpop.f32.mrf.mxu0
    %v118 = vadd.f32 0.0, %v117
    %119 = vdwg.mxu0
    %v120 = vadd.f32 %v95, %v118
    %v121 = vmul.f32 %v120, %v91
    %v122 = vxor.u32 %v121, 2147483648
    %v123 = vmul.f32 %v122, 1.442695
    %v124 = vpow.pop %v123
    %v125 = vadd.f32 %v124, 1.0
    %v126 = vrcp.pop %v125
    %v127 = vmul.f32 %v125, %v126
    %v128 = vsub.f32 1.0, %v127
    %v129 = vmul.f32 %v126, %v128
    %v130 = vadd.f32 %v126, %v129
    %vm131 = vweird.f32 %v125
    %vm132 = vweird.f32 %v126
    %vm133 = vmor %vm131, %vm132
    %v134 = vsel %vm133, %v126, %v130
    %v135 = vand.u32 2147483647, %v125
    %vm136 = vcmp.eq.f32.partialorder %v135, 8.507059e+37
    %v137 = vand.u32 %v125, 2147483648
    %v138 = vor.u32 1.1754944e-38, %v137
    %v139 = vsel %vm136, %v138, %v134
    %v140 = vmul.f32 1.0, %v139
    %v141 = vmul.f32 %v140, %v91
    %v142 = vadd.f32 %v141, %v92
    %v143 = vmul.f32 %v142, 0.0
    %145 = vrot.lane.b32.xlu0 %v142, 64
    %v146 = vpop.permute.xlu0 %145
    %v148 = vmul.f32 %v142, %v146
    %150 = vrot.lane.b32.xlu0 %v148, 32
    %v151 = vpop.permute.xlu0 %150
    %v153 = vadd.f32 %v143, %v151
    %v154 = vtanh.pop %v153
    %156 = vrot.lane.b32.xlu0 %v154, 64
    %v157 = vpop.permute.xlu0 %156
    %v159 = vmul.f32 %v142, %v157
    %s160 = sld [smem:[#allocation2 + $0x1]]
    %s161 = scalar_lea.vmem [#allocation6], %s160
    %v162 = vld [vmem:[%s161] sm:$0x1]
    %164 = vrot.lane.b32.xlu0 %v159, 32
    %v165 = vpop.permute.xlu0 %164
    %v166 = vsel %vm96, %v165, 0
    %168 = vmatpush.msra.mxu0 0.0
    %169 = vmatpush.msra.mxu0 0.0
    %170 = vmatpush.msra.mxu0 0.0
    %171 = vmatpush.msra.mxu0 0.0
    %172 = vmatpush.msra.mxu0 0.0
    %173 = vmatpush.msra.mxu0 0.0
    %174 = vmatpush.msra.mxu0 0.0
    %175 = vmatpush.msra.mxu0 0.0
    %176 = vmatpush.msra.mxu0 0.0
    %177 = vmatpush.msra.mxu0 0.0
    %178 = vmatpush.msra.mxu0 0.0
    %179 = vmatpush.msra.mxu0 0.0
    %180 = vmatpush.msra.mxu0 %v90
    %181 = vmatpush.msra.mxu0 %v89
    %182 = vmatpush.msra.mxu0 %v88
    %183 = vmatpush.msra.mxu0 %v87
    %184 = vmatmul.f32.gmra.mxu0 %v166
    %v185 = vpop.f32.mrf.mxu0
    %v186 = vadd.f32 0.0, %v185
    %187 = vdwg.mxu0
    %v188 = vadd.f32 %v162, %v186
    %v189 = vmul.f32 %v188, %v91
    %v190 = vxor.u32 %v189, 2147483648
    %v191 = vmul.f32 %v190, 1.442695
    %v192 = vpow.pop %v191
    %v193 = vadd.f32 %v192, 1.0
    %v194 = vrcp.pop %v193
    %v195 = vmul.f32 %v193, %v194
    %v196 = vsub.f32 1.0, %v195
    %v197 = vmul.f32 %v194, %v196
    %v198 = vadd.f32 %v194, %v197
    %vm199 = vweird.f32 %v193
    %vm200 = vweird.f32 %v194
    %vm201 = vmor %vm199, %vm200
    %v202 = vsel %vm201, %v194, %v198
    %v203 = vand.u32 2147483647, %v193
    %vm204 = vcmp.eq.f32.partialorder %v203, 8.507059e+37
    %v205 = vand.u32 %v193, 2147483648
    %v206 = vor.u32 1.1754944e-38, %v205
    %v207 = vsel %vm204, %v206, %v202
    %v208 = vmul.f32 1.0, %v207
    %v209 = vmul.f32 %v208, %v91
    %v210 = vadd.f32 %v209, %v92
    %v211 = vmul.f32 %v210, %v153
    %213 = vrot.lane.b32.xlu0 %v210, 64
    %v214 = vpop.permute.xlu0 %213
    %v216 = vmul.f32 %v210, %v214
    %218 = vrot.lane.b32.xlu0 %v216, 32
    %v219 = vpop.permute.xlu0 %218
    %v221 = vadd.f32 %v211, %v219
    %v222 = vtanh.pop %v221
    %224 = vrot.lane.b32.xlu0 %v222, 64
    %v225 = vpop.permute.xlu0 %224
    %v227 = vmul.f32 %v210, %v225
    %s228 = sld [smem:[#allocation2 + $0x2]]
    %s229 = scalar_lea.vmem [#allocation6], %s228
    %v230 = vld [vmem:[%s229] sm:$0x1]
    %232 = vrot.lane.b32.xlu0 %v227, 32
    %v233 = vpop.permute.xlu0 %232
    %v234 = vsel %vm96, %v233, 0
    %236 = vmatpush.msra.mxu0 0.0
    %237 = vmatpush.msra.mxu0 0.0
    %238 = vmatpush.msra.mxu0 0.0
    %239 = vmatpush.msra.mxu0 0.0
    %240 = vmatpush.msra.mxu0 0.0
    %241 = vmatpush.msra.mxu0 0.0
    %242 = vmatpush.msra.mxu0 0.0
    %243 = vmatpush.msra.mxu0 0.0
    %244 = vmatpush.msra.mxu0 0.0
    %245 = vmatpush.msra.mxu0 0.0
    %246 = vmatpush.msra.mxu0 0.0
    %247 = vmatpush.msra.mxu0 0.0
    %248 = vmatpush.msra.mxu0 %v90
    %249 = vmatpush.msra.mxu0 %v89
    %250 = vmatpush.msra.mxu0 %v88
    %251 = vmatpush.msra.mxu0 %v87
    %252 = vmatmul.f32.gmra.mxu0 %v234
    %v253 = vpop.f32.mrf.mxu0
    %v254 = vadd.f32 0.0, %v253
    %255 = vdwg.mxu0
    %v256 = vadd.f32 %v230, %v254
    %v257 = vmul.f32 %v256, %v91
    %v258 = vxor.u32 %v257, 2147483648
    %v259 = vmul.f32 %v258, 1.442695
    %v260 = vpow.pop %v259
    %v261 = vadd.f32 %v260, 1.0
    %v262 = vrcp.pop %v261
    %v263 = vmul.f32 %v261, %v262
    %v264 = vsub.f32 1.0, %v263
    %v265 = vmul.f32 %v262, %v264
    %v266 = vadd.f32 %v262, %v265
    %vm267 = vweird.f32 %v261
    %vm268 = vweird.f32 %v262
    %vm269 = vmor %vm267, %vm268
    %v270 = vsel %vm269, %v262, %v266
    %v271 = vand.u32 2147483647, %v261
    %vm272 = vcmp.eq.f32.partialorder %v271, 8.507059e+37
    %v273 = vand.u32 %v261, 2147483648
    %v274 = vor.u32 1.1754944e-38, %v273
    %v275 = vsel %vm272, %v274, %v270
    %v276 = vmul.f32 1.0, %v275
    %v277 = vmul.f32 %v276, %v91
    %v278 = vadd.f32 %v277, %v92
    %v279 = vmul.f32 %v278, %v221
    %281 = vrot.lane.b32.xlu0 %v278, 64
    %v282 = vpop.permute.xlu0 %281
    %v284 = vmul.f32 %v278, %v282
    %286 = vrot.lane.b32.xlu0 %v284, 32
    %v287 = vpop.permute.xlu0 %286
    %v289 = vadd.f32 %v279, %v287
    %v290 = vtanh.pop %v289
    %292 = vrot.lane.b32.xlu0 %v290, 64
    %v293 = vpop.permute.xlu0 %292
    %v295 = vmul.f32 %v278, %v293
    %s296 = sld [smem:[#allocation2 + $0x3]]
    %s297 = scalar_lea.vmem [#allocation6], %s296
    %v298 = vld [vmem:[%s297] sm:$0x1]
    %300 = vrot.lane.b32.xlu0 %v295, 32
    %v301 = vpop.permute.xlu0 %300
    %v302 = vsel %vm96, %v301, 0
    %304 = vmatpush.msra.mxu0 0.0
    %305 = vmatpush.msra.mxu0 0.0
    %306 = vmatpush.msra.mxu0 0.0
    %307 = vmatpush.msra.mxu0 0.0
    %308 = vmatpush.msra.mxu0 0.0
    %309 = vmatpush.msra.mxu0 0.0
    %310 = vmatpush.msra.mxu0 0.0
    %311 = vmatpush.msra.mxu0 0.0
    %312 = vmatpush.msra.mxu0 0.0
    %313 = vmatpush.msra.mxu0 0.0
    %314 = vmatpush.msra.mxu0 0.0
    %315 = vmatpush.msra.mxu0 0.0
    %316 = vmatpush.msra.mxu0 %v90
    %317 = vmatpush.msra.mxu0 %v89
    %318 = vmatpush.msra.mxu0 %v88
    %319 = vmatpush.msra.mxu0 %v87
    %320 = vmatmul.f32.gmra.mxu0 %v302
    %v321 = vpop.f32.mrf.mxu0
    %v322 = vadd.f32 0.0, %v321
    %323 = vdwg.mxu0
    %v324 = vadd.f32 %v298, %v322
    %v325 = vmul.f32 %v324, %v91
    %v326 = vxor.u32 %v325, 2147483648
    %v327 = vmul.f32 %v326, 1.442695
    %v328 = vpow.pop %v327
    %v329 = vadd.f32 %v328, 1.0
    %v330 = vrcp.pop %v329
    %v331 = vmul.f32 %v329, %v330
    %v332 = vsub.f32 1.0, %v331
    %v333 = vmul.f32 %v330, %v332
    %v334 = vadd.f32 %v330, %v333
    %vm335 = vweird.f32 %v329
    %vm336 = vweird.f32 %v330
    %vm337 = vmor %vm335, %vm336
    %v338 = vsel %vm337, %v330, %v334
    %v339 = vand.u32 2147483647, %v329
    %vm340 = vcmp.eq.f32.partialorder %v339, 8.507059e+37
    %v341 = vand.u32 %v329, 2147483648
    %v342 = vor.u32 1.1754944e-38, %v341
    %v343 = vsel %vm340, %v342, %v338
    %v344 = vmul.f32 1.0, %v343
    %v345 = vmul.f32 %v344, %v91
    %v346 = vadd.f32 %v345, %v92
    %v347 = vmul.f32 %v346, %v289
    %349 = vrot.lane.b32.xlu0 %v346, 64
    %v350 = vpop.permute.xlu0 %349
    %v352 = vmul.f32 %v346, %v350
    %354 = vrot.lane.b32.xlu0 %v352, 32
    %v355 = vpop.permute.xlu0 %354
    %v357 = vadd.f32 %v347, %v355
    %v358 = vtanh.pop %v357
    %360 = vrot.lane.b32.xlu0 %v358, 64
    %v361 = vpop.permute.xlu0 %360
    %v363 = vmul.f32 %v346, %v361
    %s364 = sld [smem:[#allocation2 + $0x4]]
    %s365 = scalar_lea.vmem [#allocation6], %s364
    %v366 = vld [vmem:[%s365] sm:$0x1]
    %368 = vrot.lane.b32.xlu0 %v363, 32
    %v369 = vpop.permute.xlu0 %368
    %v370 = vsel %vm96, %v369, 0
    %372 = vmatpush.msra.mxu0 0.0
    %373 = vmatpush.msra.mxu0 0.0
    %374 = vmatpush.msra.mxu0 0.0
    %375 = vmatpush.msra.mxu0 0.0
    %376 = vmatpush.msra.mxu0 0.0
    %377 = vmatpush.msra.mxu0 0.0
    %378 = vmatpush.msra.mxu0 0.0
    %379 = vmatpush.msra.mxu0 0.0
    %380 = vmatpush.msra.mxu0 0.0
    %381 = vmatpush.msra.mxu0 0.0
    %382 = vmatpush.msra.mxu0 0.0
    %383 = vmatpush.msra.mxu0 0.0
    %384 = vmatpush.msra.mxu0 %v90
    %385 = vmatpush.msra.mxu0 %v89
    %386 = vmatpush.msra.mxu0 %v88
    %387 = vmatpush.msra.mxu0 %v87
    %388 = vmatmul.f32.gmra.mxu0 %v370
    %v389 = vpop.f32.mrf.mxu0
    %v390 = vadd.f32 0.0, %v389
    %391 = vdwg.mxu0
    %v392 = vadd.f32 %v366, %v390
    %v393 = vmul.f32 %v392, %v91
    %v394 = vxor.u32 %v393, 2147483648
    %v395 = vmul.f32 %v394, 1.442695
    %v396 = vpow.pop %v395
    %v397 = vadd.f32 %v396, 1.0
    %v398 = vrcp.pop %v397
    %v399 = vmul.f32 %v397, %v398
    %v400 = vsub.f32 1.0, %v399
    %v401 = vmul.f32 %v398, %v400
    %v402 = vadd.f32 %v398, %v401
    %vm403 = vweird.f32 %v397
    %vm404 = vweird.f32 %v398
    %vm405 = vmor %vm403, %vm404
    %v406 = vsel %vm405, %v398, %v402
    %v407 = vand.u32 2147483647, %v397
    %vm408 = vcmp.eq.f32.partialorder %v407, 8.507059e+37
    %v409 = vand.u32 %v397, 2147483648
    %v410 = vor.u32 1.1754944e-38, %v409
    %v411 = vsel %vm408, %v410, %v406
    %v412 = vmul.f32 1.0, %v411
    %v413 = vmul.f32 %v412, %v91
    %v414 = vadd.f32 %v413, %v92
    %v415 = vmul.f32 %v414, %v357
    %417 = vrot.lane.b32.xlu0 %v414, 64
    %v418 = vpop.permute.xlu0 %417
    %v420 = vmul.f32 %v414, %v418
    %422 = vrot.lane.b32.xlu0 %v420, 32
    %v423 = vpop.permute.xlu0 %422
    %v425 = vadd.f32 %v415, %v423
    %v426 = vtanh.pop %v425
    %428 = vrot.lane.b32.xlu0 %v426, 64
    %v429 = vpop.permute.xlu0 %428
    %v431 = vmul.f32 %v414, %v429
    %s432 = sld [smem:[#allocation2 + $0x5]]
    %s433 = scalar_lea.vmem [#allocation6], %s432
    %v434 = vld [vmem:[%s433] sm:$0x1]
    %436 = vrot.lane.b32.xlu0 %v431, 32
    %v437 = vpop.permute.xlu0 %436
    %v438 = vsel %vm96, %v437, 0
    %440 = vmatpush.msra.mxu0 0.0
    %441 = vmatpush.msra.mxu0 0.0
    %442 = vmatpush.msra.mxu0 0.0
    %443 = vmatpush.msra.mxu0 0.0
    %444 = vmatpush.msra.mxu0 0.0
    %445 = vmatpush.msra.mxu0 0.0
    %446 = vmatpush.msra.mxu0 0.0
    %447 = vmatpush.msra.mxu0 0.0
    %448 = vmatpush.msra.mxu0 0.0
    %449 = vmatpush.msra.mxu0 0.0
    %450 = vmatpush.msra.mxu0 0.0
    %451 = vmatpush.msra.mxu0 0.0
    %452 = vmatpush.msra.mxu0 %v90
    %453 = vmatpush.msra.mxu0 %v89
    %454 = vmatpush.msra.mxu0 %v88
    %455 = vmatpush.msra.mxu0 %v87
    %456 = vmatmul.f32.gmra.mxu0 %v438
    %v457 = vpop.f32.mrf.mxu0
    %v458 = vadd.f32 0.0, %v457
    %459 = vdwg.mxu0
    %v460 = vadd.f32 %v434, %v458
    %v461 = vmul.f32 %v460, %v91
    %v462 = vxor.u32 %v461, 2147483648
    %v463 = vmul.f32 %v462, 1.442695
    %v464 = vpow.pop %v463
    %v465 = vadd.f32 %v464, 1.0
    %v466 = vrcp.pop %v465
    %v467 = vmul.f32 %v465, %v466
    %v468 = vsub.f32 1.0, %v467
    %v469 = vmul.f32 %v466, %v468
    %v470 = vadd.f32 %v466, %v469
    %vm471 = vweird.f32 %v465
    %vm472 = vweird.f32 %v466
    %vm473 = vmor %vm471, %vm472
    %v474 = vsel %vm473, %v466, %v470
    %v475 = vand.u32 2147483647, %v465
    %vm476 = vcmp.eq.f32.partialorder %v475, 8.507059e+37
    %v477 = vand.u32 %v465, 2147483648
    %v478 = vor.u32 1.1754944e-38, %v477
    %v479 = vsel %vm476, %v478, %v474
    %v480 = vmul.f32 1.0, %v479
    %v481 = vmul.f32 %v480, %v91
    %v482 = vadd.f32 %v481, %v92
    %v483 = vmul.f32 %v482, %v425
    %485 = vrot.lane.b32.xlu0 %v482, 64
    %v486 = vpop.permute.xlu0 %485
    %v488 = vmul.f32 %v482, %v486
    %490 = vrot.lane.b32.xlu0 %v488, 32
    %v491 = vpop.permute.xlu0 %490
    %v493 = vadd.f32 %v483, %v491
    %v494 = vtanh.pop %v493
    %496 = vrot.lane.b32.xlu0 %v494, 64
    %v497 = vpop.permute.xlu0 %496
    %v499 = vmul.f32 %v482, %v497
    %s500 = sld [smem:[#allocation2 + $0x6]]
    %s501 = scalar_lea.vmem [#allocation6], %s500
    %v502 = vld [vmem:[%s501] sm:$0x1]
    %504 = vrot.lane.b32.xlu0 %v499, 32
    %v505 = vpop.permute.xlu0 %504
    %v506 = vsel %vm96, %v505, 0
    %508 = vmatpush.msra.mxu0 0.0
    %509 = vmatpush.msra.mxu0 0.0
    %510 = vmatpush.msra.mxu0 0.0
    %511 = vmatpush.msra.mxu0 0.0
    %512 = vmatpush.msra.mxu0 0.0
    %513 = vmatpush.msra.mxu0 0.0
    %514 = vmatpush.msra.mxu0 0.0
    %515 = vmatpush.msra.mxu0 0.0
    %516 = vmatpush.msra.mxu0 0.0
    %517 = vmatpush.msra.mxu0 0.0
    %518 = vmatpush.msra.mxu0 0.0
    %519 = vmatpush.msra.mxu0 0.0
    %520 = vmatpush.msra.mxu0 %v90
    %521 = vmatpush.msra.mxu0 %v89
    %522 = vmatpush.msra.mxu0 %v88
    %523 = vmatpush.msra.mxu0 %v87
    %524 = vmatmul.f32.gmra.mxu0 %v506
    %v525 = vpop.f32.mrf.mxu0
    %v526 = vadd.f32 0.0, %v525
    %527 = vdwg.mxu0
    %v528 = vadd.f32 %v502, %v526
    %v529 = vmul.f32 %v528, %v91
    %v530 = vxor.u32 %v529, 2147483648
    %v531 = vmul.f32 %v530, 1.442695
    %v532 = vpow.pop %v531
    %v533 = vadd.f32 %v532, 1.0
    %v534 = vrcp.pop %v533
    %v535 = vmul.f32 %v533, %v534
    %v536 = vsub.f32 1.0, %v535
    %v537 = vmul.f32 %v534, %v536
    %v538 = vadd.f32 %v534, %v537
    %vm539 = vweird.f32 %v533
    %vm540 = vweird.f32 %v534
    %vm541 = vmor %vm539, %vm540
    %v542 = vsel %vm541, %v534, %v538
    %v543 = vand.u32 2147483647, %v533
    %vm544 = vcmp.eq.f32.partialorder %v543, 8.507059e+37
    %v545 = vand.u32 %v533, 2147483648
    %v546 = vor.u32 1.1754944e-38, %v545
    %v547 = vsel %vm544, %v546, %v542
    %v548 = vmul.f32 1.0, %v547
    %v549 = vmul.f32 %v548, %v91
    %v550 = vadd.f32 %v549, %v92
    %v551 = vmul.f32 %v550, %v493
    %553 = vrot.lane.b32.xlu0 %v550, 64
    %v554 = vpop.permute.xlu0 %553
    %v556 = vmul.f32 %v550, %v554
    %558 = vrot.lane.b32.xlu0 %v556, 32
    %v559 = vpop.permute.xlu0 %558
    %v561 = vadd.f32 %v551, %v559
    %v562 = vtanh.pop %v561
    %564 = vrot.lane.b32.xlu0 %v562, 64
    %v565 = vpop.permute.xlu0 %564
    %v567 = vmul.f32 %v550, %v565
    %s568 = sld [smem:[#allocation2 + $0x7]]
    %s569 = scalar_lea.vmem [#allocation6], %s568
    %v570 = vld [vmem:[%s569] sm:$0x1]
    %572 = vrot.lane.b32.xlu0 %v567, 32
    %v573 = vpop.permute.xlu0 %572
    %v574 = vsel %vm96, %v573, 0
    %576 = vmatpush.msra.mxu0 0.0
    %577 = vmatpush.msra.mxu0 0.0
    %578 = vmatpush.msra.mxu0 0.0
    %579 = vmatpush.msra.mxu0 0.0
    %580 = vmatpush.msra.mxu0 0.0
    %581 = vmatpush.msra.mxu0 0.0
    %582 = vmatpush.msra.mxu0 0.0
    %583 = vmatpush.msra.mxu0 0.0
    %584 = vmatpush.msra.mxu0 0.0
    %585 = vmatpush.msra.mxu0 0.0
    %586 = vmatpush.msra.mxu0 0.0
    %587 = vmatpush.msra.mxu0 0.0
    %588 = vmatpush.msra.mxu0 %v90
    %589 = vmatpush.msra.mxu0 %v89
    %590 = vmatpush.msra.mxu0 %v88
    %591 = vmatpush.msra.mxu0 %v87
    %592 = vmatmul.f32.gmra.mxu0 %v574
    %v593 = vpop.f32.mrf.mxu0
    %v594 = vadd.f32 0.0, %v593
    %595 = vdwg.mxu0
    %v596 = vadd.f32 %v570, %v594
    %v597 = vmul.f32 %v596, %v91
    %v598 = vxor.u32 %v597, 2147483648
    %v599 = vmul.f32 %v598, 1.442695
    %v600 = vpow.pop %v599
    %v601 = vadd.f32 %v600, 1.0
    %v602 = vrcp.pop %v601
    %v603 = vmul.f32 %v601, %v602
    %v604 = vsub.f32 1.0, %v603
    %v605 = vmul.f32 %v602, %v604
    %v606 = vadd.f32 %v602, %v605
    %vm607 = vweird.f32 %v601
    %vm608 = vweird.f32 %v602
    %vm609 = vmor %vm607, %vm608
    %v610 = vsel %vm609, %v602, %v606
    %v611 = vand.u32 2147483647, %v601
    %vm612 = vcmp.eq.f32.partialorder %v611, 8.507059e+37
    %v613 = vand.u32 %v601, 2147483648
    %v614 = vor.u32 1.1754944e-38, %v613
    %v615 = vsel %vm612, %v614, %v610
    %v616 = vmul.f32 1.0, %v615
    %v617 = vmul.f32 %v616, %v91
    %v618 = vadd.f32 %v617, %v92
    %v619 = vmul.f32 %v618, %v561
    %621 = vrot.lane.b32.xlu0 %v618, 64
    %v622 = vpop.permute.xlu0 %621
    %v624 = vmul.f32 %v618, %v622
    %626 = vrot.lane.b32.xlu0 %v624, 32
    %v627 = vpop.permute.xlu0 %626
    %v629 = vadd.f32 %v619, %v627
    %v630 = vtanh.pop %v629
    %632 = vrot.lane.b32.xlu0 %v630, 64
    %v633 = vpop.permute.xlu0 %632
    %v635 = vmul.f32 %v618, %v633
    %v636 = vrot.slane %v227, 7
    %v638 = vrot.slane %v295, 6
    %v640 = vrot.slane %v363, 5
    %v642 = vrot.slane %v431, 4
    %v644 = vrot.slane %v499, 3
    %v646 = vrot.slane %v567, 2
    %v649 = vrot.slane %v635, 1
    %vm651 = vcmask 1040384
    %v652 = vsel %vm651, %v159, %v636
    %vm653 = vcmask 1041408
    %v654 = vsel %vm653, %v652, %v638
    %vm655 = vcmask 1042432
    %v656 = vsel %vm655, %v654, %v640
    %vm657 = vcmask 1043456
    %v658 = vsel %vm657, %v656, %v642
    %vm659 = vcmask 1044480
    %v660 = vsel %vm659, %v658, %v644
    %vm661 = vcmask 1045504
    %v662 = vsel %vm661, %v660, %v646
    %vm663 = vcmask 1046528
    %v664 = vsel %vm663, %v662, %v649
    %v665 = vld [vmem:[#allocation9] sm:$0xff]
    %v666 = vld [vmem:[#allocation9 + $0x8] sm:$0xff]
    %v667 = vld [vmem:[#allocation9 + $0x10] sm:$0xff]
    %v668 = vld [vmem:[#allocation9 + $0x18] sm:$0xff]
    %v669 = vld [vmem:[%s6] sm:$0x1]
    %v671 = vperm.slane %v669, 0
    %674 = vrot.lane.b32.xlu0 %v664, 32
    %v675 = vpop.permute.xlu0 %674
    %v676 = vsel %vm96, %v675, 0
    %678 = vmatpush.msra.mxu0 0.0
    %679 = vmatpush.msra.mxu0 0.0
    %680 = vmatpush.msra.mxu0 0.0
    %681 = vmatpush.msra.mxu0 0.0
    %682 = vmatpush.msra.mxu0 0.0
    %683 = vmatpush.msra.mxu0 0.0
    %684 = vmatpush.msra.mxu0 0.0
    %685 = vmatpush.msra.mxu0 0.0
    %686 = vmatpush.msra.mxu0 0.0
    %687 = vmatpush.msra.mxu0 0.0
    %688 = vmatpush.msra.mxu0 0.0
    %689 = vmatpush.msra.mxu0 0.0
    %690 = vmatpush.msra.mxu0 %v668
    %691 = vmatpush.msra.mxu0 %v667
    %692 = vmatpush.msra.mxu0 %v666
    %693 = vmatpush.msra.mxu0 %v665
    %694 = vmatmul.f32.gmra.mxu0 %v676
    %v695 = vpop.f32.mrf.mxu0
    %v696 = vadd.f32 %v671, %v695
    %697 = vdwg.mxu0
    %698 = vmax.xlane.f32.xlu0 %v696
    %v699 = vpop.xlane.xlu0 %698
    %v700 = vsub.f32 %v696, %v699
    %v701 = vmul.f32 %v700, 1.442695
    %v702 = vpow.pop %v701
    %703 = vadd.xlane.f32.xlu0 %v702
    %v704 = vpop.xlane.xlu0 %703
    %v705 = vlog2.pop %v704
    %v706 = vmul.f32 %v705, 0.6931472
    %v707 = vadd.f32 %v699, %v706
    %v708 = vsub.f32 %v696, %v707
    %709 = vst [vmem:[#allocation10] sm:$0xff] %v708
    // Predicated region
    $region46: #{tpu_custom_call.1} parent=1 // pred_check
      _
    $region47: #{tpu_custom_call.1} parent=1 // pred_check_branch
      %711 = sbr.rel (0) target = $region49
    $region48: #{tpu_custom_call.1} parent=1 // pred_region
      %713 = vsyncadd [#allocation4], 0
      %s715 = sshll.u32 [#allocation10], 4
      %s716 = int_to_ptr.vmem [resolvable:$true] %s715
      %s717 = sshll.u32 %s7, 4
      %s718 = int_to_ptr.hbm [resolvable:$true] %s717
      %720 = dma.vmem_to_hbm [thread:$0]  %s716, 128, %s718, [#allocation4]
    $region49: #{tpu_custom_call.1} parent=1 // pred_fallthru
      _
    // Predicated region
    $region50: #{tpu_custom_call.1} parent=1 // pred_check
      _
    $region51: #{tpu_custom_call.1} parent=1 // pred_check_branch
      %722 = sbr.rel (0) target = $region53
    $region52: #{tpu_custom_call.1} parent=1 // pred_region
      %724 = dma.done [#allocation4], 128
    $region53: #{tpu_custom_call.1} parent=1 // pred_fallthru
      _
    %725 = vsyncpa [#allocation3], 1
    %726 = vsyncpa [#allocation8], 1
    %727 = vsyncpa [#allocation4], 1
    %728 = vsyncpa [#allocation5], 1

</llo_original>
